<compile_context>
chip_gen: v5e
topology: v5e:2x2
jax: 0.10.0
libtpu: 0.0.40
codegen_flags: <defaults>
</compile_context>

<pallas_src>
import functools

import jax
import jax.numpy as jnp
from jax.experimental import pallas as pl
from jax.experimental.pallas import tpu as pltpu


C_PAD = 128      # lane-dense padding for stem / block / head channel dims
K_PAD = 32       # im2col K (3*3*3 = 27) padded up for aligned vreg packing
MAX_TILE = 2048  # spatial rows per grid step (per review: big tiles hide step overhead)


# ----------------------------------------------------------------------------
# Shared in-kernel compute helpers
# ----------------------------------------------------------------------------
def _activation_dtype():
    """bf16 activations on TPUs with bf16 VPU/EUP (v6e/v7x); f32 otherwise (v5e-)."""
    try:
        kind = jax.devices()[0].device_kind.lower()
    except Exception:
        return jnp.float32
    if "v6" in kind or "v7" in kind:
        return jnp.bfloat16
    return jnp.float32


def _silu(x):
    # x * sigmoid(x) == 0.5 * x * (1 + tanh(0.5 * x)): one EUP transcendental.
    return 0.5 * x * (1.0 + jnp.tanh(0.5 * x))


def _stem_pw(p2d, w_stem_ref, b_stem_ref, w_pw_ref, b_pw_ref, act_dtype):
    """Stem 3x3/s2 conv (as matmul) + SiLU, then pointwise 1x1 conv + SiLU."""
    h1 = jnp.dot(p2d, w_stem_ref[...], preferred_element_type=jnp.float32)
    h1 = _silu((h1 + b_stem_ref[...]).astype(act_dtype))
    h2 = jnp.dot(h1.astype(jnp.bfloat16), w_pw_ref[...],
                 preferred_element_type=jnp.float32)
    h2 = _silu((h2 + b_pw_ref[...]).astype(act_dtype))
    return h2


# ----------------------------------------------------------------------------
# Regime A: whole image per block, batch folded into the block (small HW)
# ----------------------------------------------------------------------------
def _batched_kernel(patches_ref, w_stem_ref, b_stem_ref, w_pw_ref, b_pw_ref,
                    w_head_ref, o_ref, *, hw, inv_hw, act_dtype):
    h2 = _stem_pw(patches_ref[...], w_stem_ref, b_stem_ref, w_pw_ref, b_pw_ref,
                  act_dtype).astype(jnp.float32)
    rows, c2 = h2.shape
    b_tile = rows // hw
    for b in range(b_tile):                                   # static unroll
        h2b = h2[b * hw:(b + 1) * hw]                         # (hw, C_PAD)
        # 8-row-group partial sums: free reshape (native tiling) + vreg adds.
        pooled8 = h2b.reshape(hw // 8, 8, c2).sum(axis=0) * inv_hw   # (8, C_PAD)
        head = jnp.dot(pooled8.astype(jnp.bfloat16), w_head_ref[...],
                       preferred_element_type=jnp.float32)           # (8, repr)
        o_ref[b * 8:(b + 1) * 8, :] = head.astype(o_ref.dtype)


# ----------------------------------------------------------------------------
# Regime B: spatial tiling with an (8, C_PAD) pooled-sum accumulator (large HW)
# ----------------------------------------------------------------------------
def _tiled_kernel(patches_ref, w_stem_ref, b_stem_ref, w_pw_ref, b_pw_ref,
                  w_head_ref, o_ref, acc_ref, *, inv_hw, act_dtype):
    j = pl.program_id(1)

    @pl.when(j == 0)
    def _():
        acc_ref[...] = jnp.zeros_like(acc_ref)

    h2 = _stem_pw(patches_ref[0], w_stem_ref, b_stem_ref, w_pw_ref, b_pw_ref,
                  act_dtype).astype(jnp.float32)
    t_sp, c2 = h2.shape
    if t_sp % 8 == 0:
        # (8, C) accumulator: VALU vreg adds only, no per-step XLU reduce.
        acc_ref[...] += h2.reshape(t_sp // 8, 8, c2).sum(axis=0)
    else:
        # Rare fallback: HW not a multiple of 8 -> single full-extent tile.
        # TODO(synk): masked tail handling for huge non-multiple-of-8 images.
        acc_ref[0:1, :] += jnp.sum(h2, axis=0, keepdims=True)

    @pl.when(j == pl.num_programs(1) - 1)
    def _():
        pooled8 = (acc_ref[...] * inv_hw).astype(jnp.bfloat16)       # (8, C_PAD)
        head = jnp.dot(pooled8, w_head_ref[...],
                       preferred_element_type=jnp.float32)           # (8, repr)
        o_ref[...] = head[None].astype(o_ref.dtype)


def _pick_spatial_tile(hw):
    for t in range(min(hw, MAX_TILE), 7, -1):
        if t % 8 == 0 and hw % t == 0:
            return t
    return hw  # full-extent single tile (handled by the kernel's fallback branch)


# ----------------------------------------------------------------------------
# Wrapper: regime selection, grid / BlockSpecs, linear-head finalization
# ----------------------------------------------------------------------------
def fused_cnn_extractor(patches, w_stem, b_stem, w_pw, b_pw, w_head, b_head):
    """patches: (N, HW, K_PAD) bf16; weights bf16 (BN scale folded); biases f32.

    Returns (N, repr_size) f32.
    """
    n, hw, kp = patches.shape
    c1 = w_stem.shape[1]
    c2 = w_pw.shape[1]
    repr_size = w_head.shape[1]
    act_dtype = _activation_dtype()
    inv_hw = 1.0 / float(hw)

    weights = (w_stem, b_stem, w_pw, b_pw, w_head)
    weight_specs = [
        pl.BlockSpec((kp, c1), lambda *a: (0, 0)),            # stem weight (resident)
        pl.BlockSpec((1, c1), lambda *a: (0, 0)),             # stem bias
        pl.BlockSpec((c1, c2), lambda *a: (0, 0)),            # pw weight
        pl.BlockSpec((1, c2), lambda *a: (0, 0)),             # pw bias
        pl.BlockSpec((c2, repr_size), lambda *a: (0, 0)),     # head weight
    ]

    if hw % 8 == 0 and hw <= MAX_TILE:
        # Regime A: whole image in one block, fold batch elements per grid step.
        b_tile = max(1, 512 // hw)                  # target >= ~512 rows per step
        b_tile = min(b_tile, n, MAX_TILE // hw)
        n_steps = -(-n // b_tile)
        if n > 1 and n_steps < 2:                   # keep both v7x TensorCores busy
            b_tile = -(-n // 2)
            n_steps = -(-n // b_tile)
        n_pad = n_steps * b_tile
        if n_pad != n:
            patches = jnp.pad(patches, ((0, n_pad - n), (0, 0), (0, 0)))
        rows = b_tile * hw
        patches2d = patches.reshape(n_pad * hw, kp)

        kernel = functools.partial(_batched_kernel, hw=hw, inv_hw=inv_hw,
                                   act_dtype=act_dtype)
        out = pl.pallas_call(
            kernel,
            out_shape=jax.ShapeDtypeStruct((n_pad * 8, repr_size), jnp.float32),
            grid=(n_steps,),
            in_specs=[pl.BlockSpec((rows, kp), lambda i: (i, 0))] + weight_specs,
            out_specs=pl.BlockSpec((b_tile * 8, repr_size), lambda i: (i, 0)),
            compiler_params=pltpu.CompilerParams(
                dimension_semantics=("parallel",),
                vmem_limit_bytes=32 * 1024 * 1024),
        )(patches2d, *weights)
        head_parts = out.reshape(n_pad, 8, repr_size)[:n]
    else:
        # Regime B: tile the spatial axis; pooled sums accumulate in VMEM scratch.
        # TODO(synk): for N<=2 on v7x, additionally split the spatial axis
        # "parallel" (partial pooled outputs summed in the wrapper) so the
        # second TensorCore is not idle.
        t_sp = _pick_spatial_tile(hw)
        n_j = hw // t_sp
        kernel = functools.partial(_tiled_kernel, inv_hw=inv_hw, act_dtype=act_dtype)
        out = pl.pallas_call(
            kernel,
            out_shape=jax.ShapeDtypeStruct((n, 8, repr_size), jnp.float32),
            grid=(n, n_j),
            in_specs=[pl.BlockSpec((1, t_sp, kp), lambda b, j: (b, j, 0))]
                     + weight_specs,
            out_specs=pl.BlockSpec((1, 8, repr_size), lambda b, j: (b, 0, 0)),
            scratch_shapes=[pltpu.VMEM((8, c2), jnp.float32)],
            compiler_params=pltpu.CompilerParams(
                dimension_semantics=("parallel", "arbitrary"),
                vmem_limit_bytes=32 * 1024 * 1024),
        )(patches, *weights)
        head_parts = out

    # Head is linear: sum of the 8 partial head rows == head(pooled); bias added once.
    return head_parts.sum(axis=1) + b_head


# ----------------------------------------------------------------------------
# JAX glue: im2col lowering of the 3x3 stride-2 pad-1 stem conv
# ----------------------------------------------------------------------------
def im2col_3x3_s2_p1(x_nchw):
    """x: (N, C, H, W) -> patches (N, Ho*Wo, C*9), Ho = (H+1)//2 (PyTorch conv)."""
    n, c, h, w = x_nchw.shape
    ho = (h + 2 - 3) // 2 + 1
    wo = (w + 2 - 3) // 2 + 1
    xp = jnp.pad(x_nchw, ((0, 0), (0, 0), (1, 1), (1, 1)))
    cols = []
    for ky in range(3):
        for kx in range(3):
            cols.append(xp[:, :, ky:ky + 2 * ho:2, kx:kx + 2 * wo:2])  # (N,C,Ho,Wo)
    cols = jnp.stack(cols, axis=2)                        # (N, C, 9, Ho, Wo)
    cols = jnp.transpose(cols, (0, 3, 4, 1, 2))           # (N, Ho, Wo, C, 9)
    return cols.reshape(n, ho * wo, c * 9), (n, ho, wo)


# ----------------------------------------------------------------------------
# Parameters + operand preparation (fold BN scale, pad, cast to bf16)
# ----------------------------------------------------------------------------
def make_params(key, c_in=3, c_stem=32, c_block=64, repr_size=128):
    ks = jax.random.split(key, 8)
    p = {}
    p["w_stem"] = 0.1 * jax.random.normal(ks[0], (c_stem, c_in, 3, 3), jnp.float32)
    p["s_stem"] = 1.0 + 0.01 * jax.random.normal(ks[1], (c_stem,), jnp.float32)
    p["b_stem"] = 0.01 * jax.random.normal(ks[2], (c_stem,), jnp.float32)
    p["w_pw"] = 0.1 * jax.random.normal(ks[3], (c_block, c_stem, 1, 1), jnp.float32)
    p["s_pw"] = 1.0 + 0.01 * jax.random.normal(ks[4], (c_block,), jnp.float32)
    p["b_pw"] = 0.01 * jax.random.normal(ks[5], (c_block,), jnp.float32)
    p["w_head"] = 0.1 * jax.random.normal(ks[6], (repr_size, c_block), jnp.float32)
    p["b_head"] = 0.01 * jax.random.normal(ks[7], (repr_size,), jnp.float32)
    return p


def prepare_operands(params, x_nchw):
    # Cast to bf16 BEFORE im2col: halves the HBM traffic of the 9-way
    # slice/stack/transpose; bf16(im2col(x)) == im2col(bf16(x)) exactly.
    patches, _ = im2col_3x3_s2_p1(x_nchw.astype(jnp.bfloat16))      # (N, HW, C*9) bf16
    k = patches.shape[-1]
    patches = jnp.pad(patches, ((0, 0), (0, 0), (0, K_PAD - k)))

    c_stem = params["w_stem"].shape[0]
    c_block = params["w_pw"].shape[0]
    repr_size = params["w_head"].shape[0]

    # Fold BN scale into weights (f32), zero-pad to lane-dense shapes, cast bf16.
    # Padded channels stay exactly zero through the pipeline (SiLU(0)=0, zero
    # weight rows/cols), so results are unchanged.
    w_stem = params["w_stem"].reshape(c_stem, -1).T * params["s_stem"][None, :]
    w_stem = jnp.pad(w_stem, ((0, K_PAD - k), (0, C_PAD - c_stem))).astype(jnp.bfloat16)
    b_stem = jnp.pad(params["b_stem"], (0, C_PAD - c_stem)).reshape(1, C_PAD)

    w_pw = params["w_pw"].reshape(c_block, c_stem).T * params["s_pw"][None, :]
    w_pw = jnp.pad(w_pw, ((0, C_PAD - c_stem), (0, C_PAD - c_block))).astype(jnp.bfloat16)
    b_pw = jnp.pad(params["b_pw"], (0, C_PAD - c_block)).reshape(1, C_PAD)

    w_head = jnp.pad(params["w_head"].T, ((0, C_PAD - c_block), (0, 0))).astype(jnp.bfloat16)
    b_head = params["b_head"].reshape(1, repr_size)

    return (patches, w_stem, b_stem.astype(jnp.float32), w_pw,
            b_pw.astype(jnp.float32), w_head, b_head.astype(jnp.float32))


def cnn_extractor_forward(params, x_nchw):
    """x: (N, 3, H, W) f32 -> (N, 128) f32, all hot compute in one Pallas kernel."""
    return fused_cnn_extractor(*prepare_operands(params, x_nchw))


def cnn_extractor_reference(params, x_nchw):
    """Pure-JAX f32 reference for correctness checking."""
    patches, _ = im2col_3x3_s2_p1(x_nchw)                 # (N, HW, C*9)
    c_stem = params["w_stem"].shape[0]
    c_block = params["w_pw"].shape[0]
    h1 = patches @ params["w_stem"].reshape(c_stem, -1).T
    h1 = h1 * params["s_stem"] + params["b_stem"]
    h1 = h1 * jax.nn.sigmoid(h1)
    h2 = h1 @ params["w_pw"].reshape(c_block, c_stem).T
    h2 = h2 * params["s_pw"] + params["b_pw"]
    h2 = h2 * jax.nn.sigmoid(h2)
    pooled = h2.mean(axis=1)                              # (N, c_block)
    return pooled @ params["w_head"].T + params["b_head"]


if __name__ == "__main__":
    key = jax.random.PRNGKey(0)
    k_param, k_x1, k_x2, k_x3 = jax.random.split(key, 4)

    params = make_params(k_param, c_in=3, c_stem=32, c_block=64, repr_size=128)
    fwd = jax.jit(cnn_extractor_forward)

    # Case 1: small image -> batch-folded single-tile regime (HW = 64).
    x1 = jax.random.normal(k_x1, (2, 3, 16, 16), jnp.float32)   # NCHW, like PyTorch
    out1 = jax.block_until_ready(fwd(params, x1))
    assert out1.shape == (2, 128) and out1.dtype == jnp.float32
    assert bool(jnp.all(jnp.isfinite(out1)))
    ref1 = cnn_extractor_reference(params, x1)
    assert bool(jnp.allclose(out1, ref1, atol=2e-2, rtol=5e-2)), \
        float(jnp.max(jnp.abs(out1 - ref1)))

    # Case 2: larger image -> spatial-tiled accumulator regime (HW = 2304 > 2048).
    x2 = jax.random.normal(k_x2, (1, 3, 96, 96), jnp.float32)
    out2 = jax.block_until_ready(fwd(params, x2))
    assert out2.shape == (1, 128)
    ref2 = cnn_extractor_reference(params, x2)
    assert bool(jnp.allclose(out2, ref2, atol=2e-2, rtol=5e-2)), \
        float(jnp.max(jnp.abs(out2 - ref2)))

    # Case 3: batch folding with more than one image per grid step.
    x3 = jax.random.normal(k_x3, (4, 3, 16, 16), jnp.float32)
    out3 = jax.block_until_ready(fwd(params, x3))
    assert out3.shape == (4, 128)
    ref3 = cnn_extractor_reference(params, x3)
    assert bool(jnp.allclose(out3, ref3, atol=2e-2, rtol=5e-2)), \
        float(jnp.max(jnp.abs(out3 - ref3)))

    print("KERNEL_OK")
</pallas_src>

<mosaic_0001>
module attributes {stable_mosaic.version = 11 : i64} {
  func.func @_batched_kernel(%arg0: i32, %arg1: memref<64x32xbf16, #tpu.memory_space<vmem>>, %arg2: memref<32x128xbf16, #tpu.memory_space<vmem>>, %arg3: memref<1x128xf32, #tpu.memory_space<vmem>>, %arg4: memref<128x128xbf16, #tpu.memory_space<vmem>>, %arg5: memref<1x128xf32, #tpu.memory_space<vmem>>, %arg6: memref<128x128xbf16, #tpu.memory_space<vmem>>, %arg7: memref<8x128xf32, #tpu.memory_space<vmem>>) attributes {dimension_semantics = [#tpu.dimension_semantics<parallel>], iteration_bounds = array<i64: 2>, scalar_prefetch = 0 : i64, scratch_operands = 0 : i64, tpu.core_type = #tpu.core_type<tc>, window_params = [{transform_indices = @transform_0, window_bounds = array<i64: 64, 32>}, {pipeline_mode = #tpu.pipeline_mode<synchronous>, transform_indices = @transform_1, window_bounds = array<i64: 32, 128>}, {pipeline_mode = #tpu.pipeline_mode<synchronous>, transform_indices = @transform_2, window_bounds = array<i64: 1, 128>}, {pipeline_mode = #tpu.pipeline_mode<synchronous>, transform_indices = @transform_3, window_bounds = array<i64: 128, 128>}, {pipeline_mode = #tpu.pipeline_mode<synchronous>, transform_indices = @transform_4, window_bounds = array<i64: 1, 128>}, {pipeline_mode = #tpu.pipeline_mode<synchronous>, transform_indices = @transform_5, window_bounds = array<i64: 128, 128>}, {transform_indices = @transform_6, window_bounds = array<i64: 8, 128>}]} {
    %c0 = arith.constant 0 : index
    %c0_0 = arith.constant 0 : index
    %0 = vector.load %arg1[%c0, %c0_0] : memref<64x32xbf16, #tpu.memory_space<vmem>>, vector<64x32xbf16>
    %c0_1 = arith.constant 0 : index
    %c0_2 = arith.constant 0 : index
    %1 = vector.load %arg2[%c0_1, %c0_2] : memref<32x128xbf16, #tpu.memory_space<vmem>>, vector<32x128xbf16>
    %cst = arith.constant dense<0.000000e+00> : vector<64x128xf32>
    %2 = tpu.matmul %0, %1, %cst {dimension_numbers = #tpu.dot_dimension_numbers<[1], [0], [0], [1], [0, 0, 1, 1], [], []>} : vector<64x32xbf16>, vector<32x128xbf16>, vector<64x128xf32> -> vector<64x128xf32>
    %c0_3 = arith.constant 0 : index
    %c0_4 = arith.constant 0 : index
    %3 = vector.load %arg3[%c0_3, %c0_4] : memref<1x128xf32, #tpu.memory_space<vmem>>, vector<1x128xf32>
    %4 = vector.broadcast %3 : vector<1x128xf32> to vector<64x128xf32>
    %5 = arith.addf %2, %4 : vector<64x128xf32>
    %cst_5 = arith.constant 5.000000e-01 : f32
    %6 = vector.broadcast %cst_5 : f32 to vector<64x128xf32>
    %7 = arith.mulf %6, %5 : vector<64x128xf32>
    %cst_6 = arith.constant 5.000000e-01 : f32
    %8 = vector.broadcast %cst_6 : f32 to vector<64x128xf32>
    %9 = arith.mulf %8, %5 : vector<64x128xf32>
    %10 = math.tanh %9 : vector<64x128xf32>
    %cst_7 = arith.constant 1.000000e+00 : f32
    %11 = vector.broadcast %cst_7 : f32 to vector<64x128xf32>
    %12 = arith.addf %11, %10 : vector<64x128xf32>
    %13 = arith.mulf %7, %12 : vector<64x128xf32>
    %14 = arith.truncf %13 : vector<64x128xf32> to vector<64x128xbf16>
    %c0_8 = arith.constant 0 : index
    %c0_9 = arith.constant 0 : index
    %15 = vector.load %arg4[%c0_8, %c0_9] : memref<128x128xbf16, #tpu.memory_space<vmem>>, vector<128x128xbf16>
    %cst_10 = arith.constant dense<0.000000e+00> : vector<64x128xf32>
    %16 = tpu.matmul %14, %15, %cst_10 {dimension_numbers = #tpu.dot_dimension_numbers<[1], [0], [0], [1], [0, 0, 1, 1], [], []>} : vector<64x128xbf16>, vector<128x128xbf16>, vector<64x128xf32> -> vector<64x128xf32>
    %c0_11 = arith.constant 0 : index
    %c0_12 = arith.constant 0 : index
    %17 = vector.load %arg5[%c0_11, %c0_12] : memref<1x128xf32, #tpu.memory_space<vmem>>, vector<1x128xf32>
    %18 = vector.broadcast %17 : vector<1x128xf32> to vector<64x128xf32>
    %19 = arith.addf %16, %18 : vector<64x128xf32>
    %cst_13 = arith.constant 5.000000e-01 : f32
    %20 = vector.broadcast %cst_13 : f32 to vector<64x128xf32>
    %21 = arith.mulf %20, %19 : vector<64x128xf32>
    %cst_14 = arith.constant 5.000000e-01 : f32
    %22 = vector.broadcast %cst_14 : f32 to vector<64x128xf32>
    %23 = arith.mulf %22, %19 : vector<64x128xf32>
    %24 = math.tanh %23 : vector<64x128xf32>
    %cst_15 = arith.constant 1.000000e+00 : f32
    %25 = vector.broadcast %cst_15 : f32 to vector<64x128xf32>
    %26 = arith.addf %25, %24 : vector<64x128xf32>
    %27 = arith.mulf %21, %26 : vector<64x128xf32>
    %28 = vector.shape_cast %27 : vector<64x128xf32> to vector<8x8x128xf32>
    %cst_16 = arith.constant dense<0.000000e+00> : vector<8x128xf32>
    %29 = vector.multi_reduction <add>, %28, %cst_16 [0] : vector<8x8x128xf32> to vector<8x128xf32>
    %cst_17 = arith.constant 1.562500e-02 : f32
    %30 = vector.broadcast %cst_17 : f32 to vector<8x128xf32>
    %31 = arith.mulf %29, %30 : vector<8x128xf32>
    %32 = arith.truncf %31 : vector<8x128xf32> to vector<8x128xbf16>
    %c0_18 = arith.constant 0 : index
    %c0_19 = arith.constant 0 : index
    %33 = vector.load %arg6[%c0_18, %c0_19] : memref<128x128xbf16, #tpu.memory_space<vmem>>, vector<128x128xbf16>
    %cst_20 = arith.constant dense<0.000000e+00> : vector<8x128xf32>
    %34 = tpu.matmul %32, %33, %cst_20 {dimension_numbers = #tpu.dot_dimension_numbers<[1], [0], [0], [1], [0, 0, 1, 1], [], []>} : vector<8x128xbf16>, vector<128x128xbf16>, vector<8x128xf32> -> vector<8x128xf32>
    %c0_21 = arith.constant 0 : index
    %c0_22 = arith.constant 0 : index
    %35 = vector.load %arg7[%c0_21, %c0_22] : memref<8x128xf32, #tpu.memory_space<vmem>>, vector<8x128xf32>
    tpu.vector_store %arg7[%c0_21, %c0_22], %34 {strides = array<i32>} : memref<8x128xf32, #tpu.memory_space<vmem>>, vector<8x128xf32>,
    return
  }
  func.func @transform_0(%arg0: i32) -> (i32, i32) {
    %c0_i32 = arith.constant 0 : i32
    %c0_i32_0 = arith.constant 0 : i32
    return %arg0, %c0_i32 : i32, i32
  }
  func.func @transform_1(%arg0: i32) -> (i32, i32) {
    %c0_i32 = arith.constant 0 : i32
    %c0_i32_0 = arith.constant 0 : i32
    %c0_i32_1 = arith.constant 0 : i32
    return %c0_i32, %c0_i32_0 : i32, i32
  }
  func.func @transform_2(%arg0: i32) -> (i32, i32) {
    %c0_i32 = arith.constant 0 : i32
    %c0_i32_0 = arith.constant 0 : i32
    %c0_i32_1 = arith.constant 0 : i32
    return %c0_i32, %c0_i32_0 : i32, i32
  }
  func.func @transform_3(%arg0: i32) -> (i32, i32) {
    %c0_i32 = arith.constant 0 : i32
    %c0_i32_0 = arith.constant 0 : i32
    %c0_i32_1 = arith.constant 0 : i32
    return %c0_i32, %c0_i32_0 : i32, i32
  }
  func.func @transform_4(%arg0: i32) -> (i32, i32) {
    %c0_i32 = arith.constant 0 : i32
    %c0_i32_0 = arith.constant 0 : i32
    %c0_i32_1 = arith.constant 0 : i32
    return %c0_i32, %c0_i32_0 : i32, i32
  }
  func.func @transform_5(%arg0: i32) -> (i32, i32) {
    %c0_i32 = arith.constant 0 : i32
    %c0_i32_0 = arith.constant 0 : i32
    %c0_i32_1 = arith.constant 0 : i32
    return %c0_i32, %c0_i32_0 : i32, i32
  }
  func.func @transform_6(%arg0: i32) -> (i32, i32) {
    %c0_i32 = arith.constant 0 : i32
    %c0_i32_0 = arith.constant 0 : i32
    return %arg0, %c0_i32 : i32, i32
  }
}

</mosaic_0001>

<llo_original>
// kernel: cnn_extractor_forward.1
$region0: #{cnn_extractor_forward.1}
  #allocation0 [shape = 'u32[]', space=smem, size = 0x4, offset = 0x4, fixed_abs, tag = 'smem constant byte address 0x4 - core index']
  #allocation1 [shape = 'u32[72,128]{1,0:T(1,128)}', space=vmem, size = 0x9000, scoped, tag = 'internal scratch']
  %s0 = inlined_call_operand.vmem [shape: bf16[128,32], index: 0, kind: input, shape index: {}]
  %s1 = inlined_call_operand.vmem [shape: bf16[32,128], index: 1, kind: input, shape index: {}]
  %s2 = inlined_call_operand.vmem [shape: f32[1,128], index: 2, kind: input, shape index: {}]
  %s3 = inlined_call_operand.vmem [shape: bf16[128,128], index: 3, kind: input, shape index: {}]
  %s4 = inlined_call_operand.vmem [shape: f32[1,128], index: 4, kind: input, shape index: {}]
  %s5 = inlined_call_operand.vmem [shape: bf16[128,128], index: 5, kind: input, shape index: {}]
  %s6 = inlined_call_operand.vmem [shape: f32[16,128], index: 6, kind: output, shape index: {}]
  %s7 = sld [smem:[#allocation0]]
  $region57: #{cnn_extractor_forward.1} parent=0
    _
  %s9 = ssub.s32 1, %s7
  %s10 = scalar_select 0, %s9, %s7
  loop: start=0, step=1, limit=4
  $region2: #{cnn_extractor_forward.1} parent=0 // loop_pre_header
    _
  $region3: #{cnn_extractor_forward.1} parent=0 // loop_header
    %s12 = sphi 0, %s16
    %p13 = scmp.ge.s32.totalorder %s12, 4
    %s22 = sphi 0, %s24
    %s25 = sphi 0, %s22
    %s26 = sphi 0, %s25
    %s42 = sphi 0, %s26
    %s46 = sphi 0, %s46
    %s48 = sphi 0, %s46
    %s49 = sphi 0, %s48
    %s63 = sphi 0, %s49
    %s67 = sphi 0, %s67
    %s69 = sphi 0, %s67
    %s70 = sphi 0, %s69
    %s84 = sphi 0, %s70
    %s88 = sphi 0, %s88
    %s90 = sphi 0, %s88
    %s91 = sphi 0, %s90
    %s105 = sphi 0, %s91
    %s109 = sphi 0, %s109
    %s111 = sphi 0, %s109
    %s112 = sphi 0, %s111
    %s126 = sphi 0, %s112
    %s130 = sphi 0, %s130
    %s132 = sphi 0, %s130
    %s133 = sphi 0, %s132
    %s147 = sphi 0, %s133
    %s153 = sphi 0, %s155
    %s156 = sphi 0, %s153
    %s157 = sphi 0, %s156
    %s173 = sphi 0, %s157
  $region4: #{cnn_extractor_forward.1} parent=0 // loop_header_branch
    %15 = sbr.rel (%p13) target = $region8
  $region5: #{cnn_extractor_forward.1} parent=0 // loop_body
    %s17 = ssub.s32 %s12, 1
    %s18 = ssub.s32 %s12, 2
    %s19 = sadd.s32 %s12, 1
    %s20 = ssub.s32 %s12, %s19
    %p21 = scmp.eq.s32.totalorder %s20, 0
    %s23 = sadd.s32 %s22, 1
    %s24 = scalar_select %p21, %s22, %s23
    %p27 = pneg %p21
    %p28 = scmp.eq.s32.totalorder %s12, 1
    %p29 = por %p27, %p28
    %p30 = scmp.ne.s32.totalorder %s22, %s25
    %p31 = scmp.eq.s32.totalorder %s12, 0
    %p32 = por %p30, %p31
    %p33 = scmp.ne.s32.totalorder %s22, %s25
    %p34 = scmp.eq.s32.totalorder %s17, 1
    %p35 = por %p33, %p34
    %p36 = scmp.ne.s32.totalorder %s25, %s26
    %p37 = scmp.eq.s32.totalorder %s17, 0
    %p38 = por %p36, %p37
    %p39 = scmp.ne.s32.totalorder %s25, %s26
    %p40 = scmp.eq.s32.totalorder %s18, 1
    %p41 = por %p39, %p40
    %p43 = scmp.ne.s32.totalorder %s26, %s42
    %p44 = scmp.eq.s32.totalorder %s18, 0
    %p45 = por %p43, %p44
    %s47 = sadd.s32 %s46, 1
    %p50 = scmp.eq.s32.totalorder %s12, 1
    %p51 = scmp.ne.s32.totalorder %s46, %s48
    %p52 = scmp.eq.s32.totalorder %s12, 0
    %p53 = por %p51, %p52
    %p54 = scmp.ne.s32.totalorder %s46, %s48
    %p55 = scmp.eq.s32.totalorder %s17, 1
    %p56 = por %p54, %p55
    %p57 = scmp.ne.s32.totalorder %s48, %s49
    %p58 = scmp.eq.s32.totalorder %s17, 0
    %p59 = por %p57, %p58
    %p60 = scmp.ne.s32.totalorder %s48, %s49
    %p61 = scmp.eq.s32.totalorder %s18, 1
    %p62 = por %p60, %p61
    %p64 = scmp.ne.s32.totalorder %s49, %s63
    %p65 = scmp.eq.s32.totalorder %s18, 0
    %p66 = por %p64, %p65
    %s68 = sadd.s32 %s67, 1
    %p71 = scmp.eq.s32.totalorder %s12, 1
    %p72 = scmp.ne.s32.totalorder %s67, %s69
    %p73 = scmp.eq.s32.totalorder %s12, 0
    %p74 = por %p72, %p73
    %p75 = scmp.ne.s32.totalorder %s67, %s69
    %p76 = scmp.eq.s32.totalorder %s17, 1
    %p77 = por %p75, %p76
    %p78 = scmp.ne.s32.totalorder %s69, %s70
    %p79 = scmp.eq.s32.totalorder %s17, 0
    %p80 = por %p78, %p79
    %p81 = scmp.ne.s32.totalorder %s69, %s70
    %p82 = scmp.eq.s32.totalorder %s18, 1
    %p83 = por %p81, %p82
    %p85 = scmp.ne.s32.totalorder %s70, %s84
    %p86 = scmp.eq.s32.totalorder %s18, 0
    %p87 = por %p85, %p86
    %s89 = sadd.s32 %s88, 1
    %p92 = scmp.eq.s32.totalorder %s12, 1
    %p93 = scmp.ne.s32.totalorder %s88, %s90
    %p94 = scmp.eq.s32.totalorder %s12, 0
    %p95 = por %p93, %p94
    %p96 = scmp.ne.s32.totalorder %s88, %s90
    %p97 = scmp.eq.s32.totalorder %s17, 1
    %p98 = por %p96, %p97
    %p99 = scmp.ne.s32.totalorder %s90, %s91
    %p100 = scmp.eq.s32.totalorder %s17, 0
    %p101 = por %p99, %p100
    %p102 = scmp.ne.s32.totalorder %s90, %s91
    %p103 = scmp.eq.s32.totalorder %s18, 1
    %p104 = por %p102, %p103
    %p106 = scmp.ne.s32.totalorder %s91, %s105
    %p107 = scmp.eq.s32.totalorder %s18, 0
    %p108 = por %p106, %p107
    %s110 = sadd.s32 %s109, 1
    %p113 = scmp.eq.s32.totalorder %s12, 1
    %p114 = scmp.ne.s32.totalorder %s109, %s111
    %p115 = scmp.eq.s32.totalorder %s12, 0
    %p116 = por %p114, %p115
    %p117 = scmp.ne.s32.totalorder %s109, %s111
    %p118 = scmp.eq.s32.totalorder %s17, 1
    %p119 = por %p117, %p118
    %p120 = scmp.ne.s32.totalorder %s111, %s112
    %p121 = scmp.eq.s32.totalorder %s17, 0
    %p122 = por %p120, %p121
    %p123 = scmp.ne.s32.totalorder %s111, %s112
    %p124 = scmp.eq.s32.totalorder %s18, 1
    %p125 = por %p123, %p124
    %p127 = scmp.ne.s32.totalorder %s112, %s126
    %p128 = scmp.eq.s32.totalorder %s18, 0
    %p129 = por %p127, %p128
    %s131 = sadd.s32 %s130, 1
    %p134 = scmp.eq.s32.totalorder %s12, 1
    %p135 = scmp.ne.s32.totalorder %s130, %s132
    %p136 = scmp.eq.s32.totalorder %s12, 0
    %p137 = por %p135, %p136
    %p138 = scmp.ne.s32.totalorder %s130, %s132
    %p139 = scmp.eq.s32.totalorder %s17, 1
    %p140 = por %p138, %p139
    %p141 = scmp.ne.s32.totalorder %s132, %s133
    %p142 = scmp.eq.s32.totalorder %s17, 0
    %p143 = por %p141, %p142
    %p144 = scmp.ne.s32.totalorder %s132, %s133
    %p145 = scmp.eq.s32.totalorder %s18, 1
    %p146 = por %p144, %p145
    %p148 = scmp.ne.s32.totalorder %s133, %s147
    %p149 = scmp.eq.s32.totalorder %s18, 0
    %p150 = por %p148, %p149
    %s151 = ssub.s32 %s12, %s19
    %p152 = scmp.eq.s32.totalorder %s151, 0
    %s154 = sadd.s32 %s153, 1
    %s155 = scalar_select %p152, %s153, %s154
    %p158 = pneg %p152
    %p159 = scmp.eq.s32.totalorder %s12, 1
    %p160 = por %p158, %p159
    %p161 = scmp.ne.s32.totalorder %s153, %s156
    %p162 = scmp.eq.s32.totalorder %s12, 0
    %p163 = por %p161, %p162
    %p164 = scmp.ne.s32.totalorder %s153, %s156
    %p165 = scmp.eq.s32.totalorder %s17, 1
    %p166 = por %p164, %p165
    %p167 = scmp.ne.s32.totalorder %s156, %s157
    %p168 = scmp.eq.s32.totalorder %s17, 0
    %p169 = por %p167, %p168
    %p170 = scmp.ne.s32.totalorder %s156, %s157
    %p171 = scmp.eq.s32.totalorder %s18, 1
    %p172 = por %p170, %p171
    %p174 = scmp.ne.s32.totalorder %s157, %s173
    %p175 = scmp.eq.s32.totalorder %s18, 0
    %p176 = por %p174, %p175
    %p177 = scmp.le.s32.totalorder 1, %s12
    %p178 = scmp.lt.s32.totalorder %s12, 3
    %p179 = pnand %p177, %p178
    %p180 = pneg %p179
    // Predicated region
    $region9: #{cnn_extractor_forward.1} parent=5 // pred_check
      _
    $region10: #{cnn_extractor_forward.1} parent=5 // pred_check_branch
      %182 = sbr.rel (%p179) target = $region12
    $region11: #{cnn_extractor_forward.1} parent=5 // pred_region
      %s183 = ssub.s32 %s12, 1
      // Predicated region
      $region13: #{cnn_extractor_forward.1} parent=11 // pred_check
        %p184 = pneg %p59
      $region14: #{cnn_extractor_forward.1} parent=11 // pred_check_branch
        %186 = sbr.rel (%p184) target = $region16
      $region15: #{cnn_extractor_forward.1} parent=11 // pred_region
        _
      $region16: #{cnn_extractor_forward.1} parent=11 // pred_fallthru
        _
      // Predicated region
      $region17: #{cnn_extractor_forward.1} parent=11 // pred_check
        %p187 = pneg %p80
      $region18: #{cnn_extractor_forward.1} parent=11 // pred_check_branch
        %189 = sbr.rel (%p187) target = $region20
      $region19: #{cnn_extractor_forward.1} parent=11 // pred_region
        _
      $region20: #{cnn_extractor_forward.1} parent=11 // pred_fallthru
        _
      // Predicated region
      $region21: #{cnn_extractor_forward.1} parent=11 // pred_check
        %p190 = pneg %p101
      $region22: #{cnn_extractor_forward.1} parent=11 // pred_check_branch
        %192 = sbr.rel (%p190) target = $region24
      $region23: #{cnn_extractor_forward.1} parent=11 // pred_region
        _
      $region24: #{cnn_extractor_forward.1} parent=11 // pred_fallthru
        _
      // Predicated region
      $region25: #{cnn_extractor_forward.1} parent=11 // pred_check
        %p193 = pneg %p122
      $region26: #{cnn_extractor_forward.1} parent=11 // pred_check_branch
        %195 = sbr.rel (%p193) target = $region28
      $region27: #{cnn_extractor_forward.1} parent=11 // pred_region
        _
      $region28: #{cnn_extractor_forward.1} parent=11 // pred_fallthru
        _
      // Predicated region
      $region29: #{cnn_extractor_forward.1} parent=11 // pred_check
        %p196 = pneg %p143
      $region30: #{cnn_extractor_forward.1} parent=11 // pred_check_branch
        %198 = sbr.rel (%p196) target = $region32
      $region31: #{cnn_extractor_forward.1} parent=11 // pred_region
        _
      $region32: #{cnn_extractor_forward.1} parent=11 // pred_fallthru
        _
    $region12: #{cnn_extractor_forward.1} parent=5 // pred_fallthru
      _
    %p199 = scmp.lt.s32.totalorder %s12, 2
    // Predicated region
    $region33: #{cnn_extractor_forward.1} parent=5 // pred_check
      %p200 = pneg %p199
    $region34: #{cnn_extractor_forward.1} parent=5 // pred_check_branch
      %202 = sbr.rel (%p200) target = $region36
    $region35: #{cnn_extractor_forward.1} parent=5 // pred_region
      // Predicated region
      $region37: #{cnn_extractor_forward.1} parent=35 // pred_check
        %p203 = pneg %p32
      $region38: #{cnn_extractor_forward.1} parent=35 // pred_check_branch
        %205 = sbr.rel (%p203) target = $region40
      $region39: #{cnn_extractor_forward.1} parent=35 // pred_region
        %s206 = smul.u32 8, %s12
        %p207 = scmp.lt.s32.totalorder %s206, 15
        %s208 = scalar_select %p207, %s206, 15
        %s209 = smul.addr %s208, 4
        %s210 = scalar_lea.vmem %s0, %s209
        %s211 = smul.u32 8, %s12
      $region40: #{cnn_extractor_forward.1} parent=35 // pred_fallthru
        _
    $region36: #{cnn_extractor_forward.1} parent=5 // pred_fallthru
      _
    %p212 = scmp.le.s32.totalorder 1, %s12
    %p213 = scmp.lt.s32.totalorder %s12, 3
    %p214 = pnand %p212, %p213
    %p215 = pneg %p214
    // Predicated region
    $region41: #{cnn_extractor_forward.1} parent=5 // pred_check
      _
    $region42: #{cnn_extractor_forward.1} parent=5 // pred_check_branch
      %217 = sbr.rel (%p214) target = $region44
    $region43: #{cnn_extractor_forward.1} parent=5 // pred_region
      %s218 = ssub.s32 %s12, 1
      %s219 = smul.u32 8, %s17
      %p220 = scmp.lt.s32.totalorder %s219, 15
      %s221 = scalar_select %p220, %s219, 15
      %s222 = smul.addr %s221, 4
      %s223 = scalar_lea.vmem %s0, %s222
      %p224 = pneg %p38
      %p225 = pneg %p35
      %p226 = pneg %p59
      %p227 = pneg %p56
      %p228 = pneg %p80
      %p229 = pneg %p77
      %p230 = pneg %p101
      %p231 = pneg %p98
      %p232 = pneg %p122
      %p233 = pneg %p119
      %p234 = pneg %p143
      %p235 = pneg %p140
      %p236 = pneg %p169
      %p237 = pneg %p166
      %p238 = scmp.lt.s32.totalorder %s17, 1
      %s239 = scalar_select %p238, %s17, 1
      %s240 = smul.addr %s239, 8
      %s241 = scalar_lea.vmem %s6, %s240
      %s242 = smul.u32 8, %s17
      %p243 = scmp.lt.s32.totalorder %s242, 15
      %s244 = scalar_select %p243, %s242, 15
      %s245 = smul.addr %s244, 4
      %s246 = scalar_lea.vmem %s0, %s245
      %s247 = smul.u32 8, %s17
      %p248 = scmp.lt.s32.totalorder %s17, 1
      %s249 = scalar_select %p248, %s17, 1
      %s250 = smul.addr %s249, 8
      %s251 = scalar_lea.vmem %s6, %s250
      %v253 = vld [vmem:[%s246] sm:$0xf]
      %v254 = vld [vmem:[%s246 + $0x4] sm:$0xf]
      %v255 = vld [vmem:[%s246 + $0x8] sm:$0xf]
      %v256 = vld [vmem:[%s246 + $0xc] sm:$0xf]
      %v257 = vld [vmem:[%s246 + $0x10] sm:$0xf]
      %v258 = vld [vmem:[%s246 + $0x14] sm:$0xf]
      %v259 = vld [vmem:[%s246 + $0x18] sm:$0xf]
      %v260 = vld [vmem:[%s246 + $0x1c] sm:$0xf]
      %v261 = vld [vmem:[%s1] sm:$0xf]
      %v262 = vld [vmem:[%s1 + $0x4] sm:$0xf]
      %v263 = vld [vmem:[%s1 + $0x8] sm:$0xf]
      %v264 = vld [vmem:[%s1 + $0xc] sm:$0xf]
      %v265 = vld [vmem:[%s2] sm:$0x1]
      %v267 = vperm.slane %v265, 0
      %v277 = vunpack.c.l.b16 %v253
      %v278 = vunpack.c.l.b16 %v254
      %v279 = vunpack.c.l.b16 %v255
      %v280 = vunpack.c.l.b16 %v256
      %v281 = vunpack.c.l.b16 %v257
      %v282 = vunpack.c.l.b16 %v258
      %v283 = vunpack.c.l.b16 %v259
      %v284 = vunpack.c.l.b16 %v260
      %v285 = vpack.c.b16 %v278, %v277
      %v286 = vpack.c.b16 %v280, %v279
      %v287 = vpack.c.b16 %v282, %v281
      %v288 = vpack.c.b16 %v284, %v283
      %v293 = vunpack.c.l.b16 %v261
      %v294 = vunpack.c.l.b16 %v262
      %v295 = vunpack.c.l.b16 %v263
      %v296 = vunpack.c.l.b16 %v264
      %v297 = vpack.c.b16 %v294, %v293
      %v298 = vpack.c.b16 %v296, %v295
      %vm301 = vcmask 261120
      %v303 = vsel %vm301, %v285, 0
      %v306 = vsel %vm301, %v286, 0
      %v309 = vsel %vm301, %v287, 0
      %v312 = vsel %vm301, %v288, 0
      %314 = vmatpush.bf16.msra.mxu0 0
      %315 = vmatpush.bf16.msra.mxu0 0
      %316 = vmatpush.bf16.msra.mxu0 0
      %317 = vmatpush.bf16.msra.mxu0 0
      %318 = vmatpush.bf16.msra.mxu0 0
      %319 = vmatpush.bf16.msra.mxu0 0
      %320 = vmatpush.bf16.msra.mxu0 %v298
      %321 = vmatpush.bf16.msra.mxu0 %v297
      %322 = vmatmul.bf16.gmra.mxu0 %v303
      %v323 = vpop.f32.mrf.mxu0
      %v324 = vadd.f32 %v267, %v323
      %v325 = vpop.f32.mrf.mxu0
      %v326 = vadd.f32 %v267, %v325
      %327 = vmatmul.bf16.gmra.mxu0 %v306
      %v328 = vpop.f32.mrf.mxu0
      %v329 = vadd.f32 %v267, %v328
      %v330 = vpop.f32.mrf.mxu0
      %v331 = vadd.f32 %v267, %v330
      %332 = vmatmul.bf16.gmra.mxu0 %v309
      %v333 = vpop.f32.mrf.mxu0
      %v334 = vadd.f32 %v267, %v333
      %v335 = vpop.f32.mrf.mxu0
      %v336 = vadd.f32 %v267, %v335
      %337 = vmatmul.bf16.gmra.mxu0 %v312
      %v338 = vpop.f32.mrf.mxu0
      %v339 = vadd.f32 %v267, %v338
      %v340 = vpop.f32.mrf.mxu0
      %v341 = vadd.f32 %v267, %v340
      %342 = vdwg.mxu0
      %v343 = vmul.f32 %v324, 0.5
      %v344 = vmul.f32 %v326, 0.5
      %v345 = vmul.f32 %v329, 0.5
      %v346 = vmul.f32 %v331, 0.5
      %v347 = vmul.f32 %v334, 0.5
      %v348 = vmul.f32 %v336, 0.5
      %v349 = vmul.f32 %v339, 0.5
      %v350 = vmul.f32 %v341, 0.5
      %v351 = vtanh.pop %v343
      %v352 = vtanh.pop %v344
      %v353 = vtanh.pop %v345
      %v354 = vtanh.pop %v346
      %v355 = vtanh.pop %v347
      %v356 = vtanh.pop %v348
      %v357 = vtanh.pop %v349
      %v358 = vtanh.pop %v350
      %v359 = vadd.f32 %v351, 1.0
      %v360 = vadd.f32 %v352, 1.0
      %v361 = vadd.f32 %v353, 1.0
      %v362 = vadd.f32 %v354, 1.0
      %v363 = vadd.f32 %v355, 1.0
      %v364 = vadd.f32 %v356, 1.0
      %v365 = vadd.f32 %v357, 1.0
      %v366 = vadd.f32 %v358, 1.0
      %v367 = vmul.f32 %v343, %v359
      %v368 = vmul.f32 %v344, %v360
      %v369 = vmul.f32 %v345, %v361
      %v370 = vmul.f32 %v346, %v362
      %v371 = vmul.f32 %v347, %v363
      %v372 = vmul.f32 %v348, %v364
      %v373 = vmul.f32 %v349, %v365
      %v374 = vmul.f32 %v350, %v366
      %v375 = vpack.c.bf16 %v368, %v367
      %v376 = vpack.c.bf16 %v370, %v369
      %v377 = vpack.c.bf16 %v372, %v371
      %v378 = vpack.c.bf16 %v374, %v373
      %v379 = vld [vmem:[%s3] sm:$0xf]
      %v380 = vld [vmem:[%s3 + $0x4] sm:$0xf]
      %v381 = vld [vmem:[%s3 + $0x8] sm:$0xf]
      %v382 = vld [vmem:[%s3 + $0xc] sm:$0xf]
      %v383 = vld [vmem:[%s3 + $0x10] sm:$0xf]
      %v384 = vld [vmem:[%s3 + $0x14] sm:$0xf]
      %v385 = vld [vmem:[%s3 + $0x18] sm:$0xf]
      %v386 = vld [vmem:[%s3 + $0x1c] sm:$0xf]
      %v387 = vld [vmem:[%s3 + $0x20] sm:$0xf]
      %v388 = vld [vmem:[%s3 + $0x24] sm:$0xf]
      %v389 = vld [vmem:[%s3 + $0x28] sm:$0xf]
      %v390 = vld [vmem:[%s3 + $0x2c] sm:$0xf]
      %v391 = vld [vmem:[%s3 + $0x30] sm:$0xf]
      %v392 = vld [vmem:[%s3 + $0x34] sm:$0xf]
      %v393 = vld [vmem:[%s3 + $0x38] sm:$0xf]
      %v394 = vld [vmem:[%s3 + $0x3c] sm:$0xf]
      %v395 = vld [vmem:[%s4] sm:$0x1]
      %v397 = vperm.slane %v395, 0
      %v415 = vunpack.c.l.b16 %v379
      %v416 = vunpack.c.l.b16 %v380
      %v417 = vunpack.c.l.b16 %v381
      %v418 = vunpack.c.l.b16 %v382
      %v419 = vunpack.c.l.b16 %v383
      %v420 = vunpack.c.l.b16 %v384
      %v421 = vunpack.c.l.b16 %v385
      %v422 = vunpack.c.l.b16 %v386
      %v423 = vunpack.c.l.b16 %v387
      %v424 = vunpack.c.l.b16 %v388
      %v425 = vunpack.c.l.b16 %v389
      %v426 = vunpack.c.l.b16 %v390
      %v427 = vunpack.c.l.b16 %v391
      %v428 = vunpack.c.l.b16 %v392
      %v429 = vunpack.c.l.b16 %v393
      %v430 = vunpack.c.l.b16 %v394
      %v431 = vpack.c.b16 %v416, %v415
      %v432 = vpack.c.b16 %v418, %v417
      %v433 = vpack.c.b16 %v420, %v419
      %v434 = vpack.c.b16 %v422, %v421
      %v435 = vpack.c.b16 %v424, %v423
      %v436 = vpack.c.b16 %v426, %v425
      %v437 = vpack.c.b16 %v428, %v427
      %v438 = vpack.c.b16 %v430, %v429
      %447 = vmatpush.bf16.msra.mxu0 %v438
      %448 = vmatpush.bf16.msra.mxu0 %v437
      %449 = vmatpush.bf16.msra.mxu0 %v436
      %450 = vmatpush.bf16.msra.mxu0 %v435
      %451 = vmatpush.bf16.msra.mxu0 %v434
      %452 = vmatpush.bf16.msra.mxu0 %v433
      %453 = vmatpush.bf16.msra.mxu0 %v432
      %454 = vmatpush.bf16.msra.mxu0 %v431
      %455 = vmatmul.bf16.gmra.mxu0 %v375
      %v456 = vpop.f32.mrf.mxu0
      %v457 = vadd.f32 %v397, %v456
      %v458 = vpop.f32.mrf.mxu0
      %v459 = vadd.f32 %v397, %v458
      %460 = vmatmul.bf16.gmra.mxu0 %v376
      %v461 = vpop.f32.mrf.mxu0
      %v462 = vadd.f32 %v397, %v461
      %v463 = vpop.f32.mrf.mxu0
      %v464 = vadd.f32 %v397, %v463
      %465 = vmatmul.bf16.gmra.mxu0 %v377
      %v466 = vpop.f32.mrf.mxu0
      %v467 = vadd.f32 %v397, %v466
      %v468 = vpop.f32.mrf.mxu0
      %v469 = vadd.f32 %v397, %v468
      %470 = vmatmul.bf16.gmra.mxu0 %v378
      %v471 = vpop.f32.mrf.mxu0
      %v472 = vadd.f32 %v397, %v471
      %v473 = vpop.f32.mrf.mxu0
      %v474 = vadd.f32 %v397, %v473
      %475 = vdwg.mxu0
      %v476 = vmul.f32 %v457, 0.5
      %v477 = vmul.f32 %v459, 0.5
      %v478 = vmul.f32 %v462, 0.5
      %v479 = vmul.f32 %v464, 0.5
      %v480 = vmul.f32 %v467, 0.5
      %v481 = vmul.f32 %v469, 0.5
      %v482 = vmul.f32 %v472, 0.5
      %v483 = vmul.f32 %v474, 0.5
      %v484 = vtanh.pop %v476
      %v485 = vtanh.pop %v477
      %v486 = vtanh.pop %v478
      %v487 = vtanh.pop %v479
      %v488 = vtanh.pop %v480
      %v489 = vtanh.pop %v481
      %v490 = vtanh.pop %v482
      %v491 = vtanh.pop %v483
      %v492 = vadd.f32 %v484, 1.0
      %v493 = vadd.f32 %v485, 1.0
      %v494 = vadd.f32 %v486, 1.0
      %v495 = vadd.f32 %v487, 1.0
      %v496 = vadd.f32 %v488, 1.0
      %v497 = vadd.f32 %v489, 1.0
      %v498 = vadd.f32 %v490, 1.0
      %v499 = vadd.f32 %v491, 1.0
      %v500 = vmul.f32 %v476, %v492
      %v501 = vmul.f32 %v477, %v493
      %v502 = vmul.f32 %v478, %v494
      %v503 = vmul.f32 %v479, %v495
      %v504 = vmul.f32 %v480, %v496
      %v505 = vmul.f32 %v481, %v497
      %v506 = vmul.f32 %v482, %v498
      %v507 = vmul.f32 %v483, %v499
      %v508 = vadd.f32 %v500, %v501
      %v509 = vadd.f32 %v508, %v502
      %v510 = vadd.f32 %v509, %v503
      %v511 = vadd.f32 %v510, %v504
      %v512 = vadd.f32 %v511, %v505
      %v513 = vadd.f32 %v512, %v506
      %v514 = vadd.f32 %v513, %v507
      %v515 = vmul.f32 %v514, 0.015625
      %v516 = vpack.c.bf16 %v515, %v515
      %v517 = vld [vmem:[%s5] sm:$0xf]
      %v518 = vld [vmem:[%s5 + $0x4] sm:$0xf]
      %v519 = vld [vmem:[%s5 + $0x8] sm:$0xf]
      %v520 = vld [vmem:[%s5 + $0xc] sm:$0xf]
      %v521 = vld [vmem:[%s5 + $0x10] sm:$0xf]
      %v522 = vld [vmem:[%s5 + $0x14] sm:$0xf]
      %v523 = vld [vmem:[%s5 + $0x18] sm:$0xf]
      %v524 = vld [vmem:[%s5 + $0x1c] sm:$0xf]
      %v525 = vld [vmem:[%s5 + $0x20] sm:$0xf]
      %v526 = vld [vmem:[%s5 + $0x24] sm:$0xf]
      %v527 = vld [vmem:[%s5 + $0x28] sm:$0xf]
      %v528 = vld [vmem:[%s5 + $0x2c] sm:$0xf]
      %v529 = vld [vmem:[%s5 + $0x30] sm:$0xf]
      %v530 = vld [vmem:[%s5 + $0x34] sm:$0xf]
      %v531 = vld [vmem:[%s5 + $0x38] sm:$0xf]
      %v532 = vld [vmem:[%s5 + $0x3c] sm:$0xf]
      %v549 = vunpack.c.l.b16 %v517
      %v550 = vunpack.c.l.b16 %v518
      %v551 = vunpack.c.l.b16 %v519
      %v552 = vunpack.c.l.b16 %v520
      %v553 = vunpack.c.l.b16 %v521
      %v554 = vunpack.c.l.b16 %v522
      %v555 = vunpack.c.l.b16 %v523
      %v556 = vunpack.c.l.b16 %v524
      %v557 = vunpack.c.l.b16 %v525
      %v558 = vunpack.c.l.b16 %v526
      %v559 = vunpack.c.l.b16 %v527
      %v560 = vunpack.c.l.b16 %v528
      %v561 = vunpack.c.l.b16 %v529
      %v562 = vunpack.c.l.b16 %v530
      %v563 = vunpack.c.l.b16 %v531
      %v564 = vunpack.c.l.b16 %v532
      %v565 = vpack.c.b16 %v550, %v549
      %v566 = vpack.c.b16 %v552, %v551
      %v567 = vpack.c.b16 %v554, %v553
      %v568 = vpack.c.b16 %v556, %v555
      %v569 = vpack.c.b16 %v558, %v557
      %v570 = vpack.c.b16 %v560, %v559
      %v571 = vpack.c.b16 %v562, %v561
      %v572 = vpack.c.b16 %v564, %v563
      %581 = vmatpush.bf16.msra.mxu0 %v572
      %582 = vmatpush.bf16.msra.mxu0 %v571
      %583 = vmatpush.bf16.msra.mxu0 %v570
      %584 = vmatpush.bf16.msra.mxu0 %v569
      %585 = vmatpush.bf16.msra.mxu0 %v568
      %586 = vmatpush.bf16.msra.mxu0 %v567
      %587 = vmatpush.bf16.msra.mxu0 %v566
      %588 = vmatpush.bf16.msra.mxu0 %v565
      %589 = vmatmul.bf16.gmra.mxu0 %v516
      %v590 = vpop.f32.mrf.mxu0
      %v591 = vadd.f32 0.0, %v590
      %v592 = vpop.f32.mrf.mxu0
      %593 = vdwg.mxu0
      %594 = vst [vmem:[%s251] sm:$0xff] %v591
      %p595 = scmp.lt.s32.totalorder %s17, 1
      %s596 = scalar_select %p595, %s17, 1
      %s597 = smul.addr %s596, 8
      %s598 = scalar_lea.vmem %s6, %s597
      // Predicated region
      $region45: #{cnn_extractor_forward.1} parent=43 // pred_check
        %p599 = pneg %p166
      $region46: #{cnn_extractor_forward.1} parent=43 // pred_check_branch
        %601 = sbr.rel (%p599) target = $region48
      $region47: #{cnn_extractor_forward.1} parent=43 // pred_region
        _
      $region48: #{cnn_extractor_forward.1} parent=43 // pred_fallthru
        _
    $region44: #{cnn_extractor_forward.1} parent=5 // pred_fallthru
      _
    %p602 = scmp.le.s32.totalorder 2, %s12
    // Predicated region
    $region49: #{cnn_extractor_forward.1} parent=5 // pred_check
      %p603 = pneg %p602
    $region50: #{cnn_extractor_forward.1} parent=5 // pred_check_branch
      %605 = sbr.rel (%p603) target = $region52
    $region51: #{cnn_extractor_forward.1} parent=5 // pred_region
      %s606 = ssub.s32 %s12, 2
      // Predicated region
      $region53: #{cnn_extractor_forward.1} parent=51 // pred_check
        %p607 = pneg %p172
      $region54: #{cnn_extractor_forward.1} parent=51 // pred_check_branch
        %609 = sbr.rel (%p607) target = $region56
      $region55: #{cnn_extractor_forward.1} parent=51 // pred_region
        %p610 = scmp.lt.s32.totalorder %s18, 1
        %s611 = scalar_select %p610, %s18, 1
        %s612 = smul.addr %s611, 8
        %s613 = scalar_lea.vmem %s6, %s612
      $region56: #{cnn_extractor_forward.1} parent=51 // pred_fallthru
        _
    $region52: #{cnn_extractor_forward.1} parent=5 // pred_fallthru
      _
  $region6: #{cnn_extractor_forward.1} parent=0 // loop_footer
    %s16 = sadd.s32 1, %s12
  $region7: #{cnn_extractor_forward.1} parent=0 // loop_footer_branch
    %11 = sbr.rel target = $region3
  $region8: #{cnn_extractor_forward.1} parent=0 // loop_exit
    _

</llo_original>
